<compile_context>
chip_gen: v5e
topology: v5e:2x2
jax: 0.10.0
libtpu: 0.0.40
codegen_flags: <defaults>
</compile_context>

<pallas_src>
import functools

import jax
import jax.numpy as jnp
from jax.experimental import pallas as pl
from jax.experimental.pallas import tpu as pltpu

EPS = 1e-5  # nn.LayerNorm default


def _merge_kernel(top_ref, bot_ref, wt_ref, wb_ref, bias_ref, o_ref):
    # top_ref, bot_ref : (TR, W2, 2C)  per-token features [x0|x2] / [x1|x3]
    # wt_ref, wb_ref   : (2C, CO)      gamma-folded weight slices
    # bias_ref         : (1, CO)       beta @ W   (f32)
    # o_ref            : (TR, W2, CO)
    tf = top_ref[...].astype(jnp.float32)
    bf = bot_ref[...].astype(jnp.float32)

    inv_nf = 1.0 / (2 * tf.shape[-1])  # 1 / (4C), compile-time constant
    s = jnp.sum(tf, axis=-1, keepdims=True) + jnp.sum(bf, axis=-1, keepdims=True)
    ss = jnp.sum(tf * tf, axis=-1, keepdims=True) + jnp.sum(bf * bf, axis=-1, keepdims=True)
    mean = s * inv_nf
    var = jnp.maximum(ss * inv_nf - mean * mean, 0.0)
    inv = jax.lax.rsqrt(var + EPS)

    # Normalize in f32, feed the MXU in the weight's native dtype.
    xt = ((tf - mean) * inv).astype(wt_ref.dtype)
    xb = ((bf - mean) * inv).astype(wb_ref.dtype)

    tr, w2, c2 = tf.shape
    co = o_ref.shape[-1]
    acc = jnp.dot(xt.reshape(tr * w2, c2), wt_ref[...],
                  preferred_element_type=jnp.float32)
    acc = acc + jnp.dot(xb.reshape(tr * w2, c2), wb_ref[...],
                        preferred_element_type=jnp.float32)
    acc = acc + bias_ref[...]
    o_ref[...] = acc.reshape(tr, w2, co).astype(o_ref.dtype)


def _pick_row_tile(h2, row_bytes, budget=4 * 1024 * 1024):
    """Largest divisor of h2 whose (TR, W2, 2C) input tile stays under budget."""
    cap = max(1, min(h2, budget // max(row_bytes, 1)))
    for tr in range(cap, 0, -1):
        if h2 % tr == 0:
            return tr
    return 1


def patch_merging_forward(x, input_resolution, gamma, beta, w):
    """
    x: (b, h*w, c) -> (b, (h//2)*(w//2), 2*c)

    gamma, beta: LayerNorm affine params of shape (4*c,)
    w: reduction weight of shape (4*c, 2*c)   (== PyTorch Linear.weight.T)
    """
    h, w_res = input_resolution
    b, seq_len, c = x.shape
    assert seq_len == h * w_res, "input feature has wrong size"
    assert h % 2 == 0 and w_res % 2 == 0, f"x size ({h}*{w_res}) are not even."

    h2, w2 = h // 2, w_res // 2
    c2 = 2 * c
    co = w.shape[1]

    # Free reshape: (b, h, w, c) -> (b, h2, 2, w2, 2c).
    #   dh=0 slice: token(i,j) features = [x[2i,2j] | x[2i,2j+1]]   = [x0 | x2]
    #   dh=1 slice: token(i,j) features = [x[2i+1,2j] | x[2i+1,2j+1]] = [x1 | x3]
    xs = x.reshape(b, h2, 2, w2, c2)

    # Fold LayerNorm affine into the reduction weight / bias (f32 fold, then
    # cast back to the weight's native dtype for the MXU).
    gf = gamma.astype(jnp.float32)
    wf = w.astype(jnp.float32)
    wg = gf[:, None] * wf                              # (4c, co)
    bias = beta.astype(jnp.float32)[None, :] @ wf      # (1, co), stays f32
    w_top = jnp.concatenate([wg[0 * c:1 * c], wg[2 * c:3 * c]], axis=0).astype(w.dtype)
    w_bot = jnp.concatenate([wg[1 * c:2 * c], wg[3 * c:4 * c]], axis=0).astype(w.dtype)

    # Row tiling over the half-resolution grid.
    itemsize = x.dtype.itemsize
    row_bytes = w2 * c2 * itemsize
    tr = _pick_row_tile(h2, row_bytes)
    grid = (b, h2 // tr)

    # Explicit VMEM budget: double-buffered in/out tiles + resident weights.
    in_tile = tr * w2 * c2 * itemsize
    out_tile = tr * w2 * co * itemsize
    wgt_bytes = 2 * c2 * co * w_top.dtype.itemsize + co * 4
    need = 2 * 2 * in_tile + 2 * out_tile + 2 * wgt_bytes + (1 << 20)
    vmem_limit = int(min(max(2 * need, 32 * 1024 * 1024), 64 * 1024 * 1024))

    out = pl.pallas_call(
        _merge_kernel,
        out_shape=jax.ShapeDtypeStruct((b, h2, w2, co), x.dtype),
        grid_spec=pltpu.PrefetchScalarGridSpec(
            num_scalar_prefetch=0,
            grid=grid,
            in_specs=[
                pl.BlockSpec((None, tr, None, w2, c2),
                             lambda bi, ri: (bi, ri, 0, 0, 0)),   # [x0 | x2]
                pl.BlockSpec((None, tr, None, w2, c2),
                             lambda bi, ri: (bi, ri, 1, 0, 0)),   # [x1 | x3]
                pl.BlockSpec((c2, co), lambda bi, ri: (0, 0)),
                pl.BlockSpec((c2, co), lambda bi, ri: (0, 0)),
                pl.BlockSpec((1, co), lambda bi, ri: (0, 0)),
            ],
            out_specs=pl.BlockSpec((None, tr, w2, co),
                                   lambda bi, ri: (bi, ri, 0, 0)),
        ),
        compiler_params=pltpu.CompilerParams(
            dimension_semantics=("parallel", "parallel"),
            vmem_limit_bytes=vmem_limit,
        ),
    )(xs, xs, w_top, w_bot, bias)

    return out.reshape(b, h2 * w2, co)


def _reference(x, input_resolution, gamma, beta, w):
    """Pure-JAX reference for verification."""
    h, w_res = input_resolution
    b, _, c = x.shape
    xr = x.reshape(b, h, w_res, c)
    x0 = xr[:, 0::2, 0::2, :]
    x1 = xr[:, 1::2, 0::2, :]
    x2 = xr[:, 0::2, 1::2, :]
    x3 = xr[:, 1::2, 1::2, :]
    xm = jnp.concatenate([x0, x1, x2, x3], axis=-1).reshape(b, -1, 4 * c)
    mean = jnp.mean(xm, axis=-1, keepdims=True)
    var = jnp.mean((xm - mean) ** 2, axis=-1, keepdims=True)
    xn = (xm - mean) / jnp.sqrt(var + EPS) * gamma + beta
    return xn @ w


if __name__ == "__main__":
    # Small shapes consistent with the module: b=2, dim=4, resolution 16x16.
    b, dim = 2, 4
    h, w_res = 16, 16
    input_resolution = (h, w_res)

    key = jax.random.PRNGKey(0)
    kx, kg, kb, kw = jax.random.split(key, 4)

    x = jax.random.normal(kx, (b, h * w_res, dim), dtype=jnp.float32)

    # Synthetic parameters with the module's shapes:
    #   norm = LayerNorm(4*dim)                       -> gamma, beta: (4*dim,)
    #   reduction = Linear(4*dim, 2*dim, bias=False)  -> stored transposed (4*dim, 2*dim)
    gamma = 1.0 + 0.1 * jax.random.normal(kg, (4 * dim,), dtype=jnp.float32)
    beta = 0.1 * jax.random.normal(kb, (4 * dim,), dtype=jnp.float32)
    w = jax.random.normal(kw, (4 * dim, 2 * dim), dtype=jnp.float32) / jnp.sqrt(4.0 * dim)

    fwd = jax.jit(functools.partial(patch_merging_forward,
                                    input_resolution=input_resolution))
    out = fwd(x, gamma=gamma, beta=beta, w=w)
    out = jax.block_until_ready(out)

    ref = _reference(x, input_resolution, gamma, beta, w)
    assert out.shape == (b, (h // 2) * (w_res // 2), 2 * dim), out.shape
    assert jnp.allclose(out, ref, atol=1e-4, rtol=1e-4), "mismatch vs reference"

    print("KERNEL_OK")
</pallas_src>

<mosaic_0001>
module attributes {stable_mosaic.version = 11 : i64} {
  func.func @_merge_kernel(%arg0: i32, %arg1: i32, %arg2: memref<1x8x1x8x8xf32, #tpu.memory_space<vmem>>, %arg3: memref<1x8x1x8x8xf32, #tpu.memory_space<vmem>>, %arg4: memref<8x8xf32, #tpu.memory_space<vmem>>, %arg5: memref<8x8xf32, #tpu.memory_space<vmem>>, %arg6: memref<1x8xf32, #tpu.memory_space<vmem>>, %arg7: memref<1x8x8x8xf32, #tpu.memory_space<vmem>>) attributes {dimension_semantics = [#tpu.dimension_semantics<parallel>, #tpu.dimension_semantics<parallel>], iteration_bounds = array<i64: 2, 1>, scalar_prefetch = 0 : i64, scratch_operands = 0 : i64, tpu.core_type = #tpu.core_type<tc>, window_params = [{transform_indices = @transform_0, window_bounds = array<i64: 1, 8, 1, 8, 8>}, {transform_indices = @transform_1, window_bounds = array<i64: 1, 8, 1, 8, 8>}, {pipeline_mode = #tpu.pipeline_mode<synchronous>, transform_indices = @transform_2, window_bounds = array<i64: 8, 8>}, {pipeline_mode = #tpu.pipeline_mode<synchronous>, transform_indices = @transform_3, window_bounds = array<i64: 8, 8>}, {pipeline_mode = #tpu.pipeline_mode<synchronous>, transform_indices = @transform_4, window_bounds = array<i64: 1, 8>}, {transform_indices = @transform_5, window_bounds = array<i64: 1, 8, 8, 8>}]} {
    %c0 = arith.constant 0 : index
    %c0_0 = arith.constant 0 : index
    %c0_1 = arith.constant 0 : index
    %c0_2 = arith.constant 0 : index
    %c0_3 = arith.constant 0 : index
    %0 = vector.load %arg2[%c0, %c0_0, %c0_1, %c0_2, %c0_3] : memref<1x8x1x8x8xf32, #tpu.memory_space<vmem>>, vector<1x8x1x8x8xf32>
    %1 = vector.shape_cast %0 : vector<1x8x1x8x8xf32> to vector<8x8x8xf32>
    %c0_4 = arith.constant 0 : index
    %c0_5 = arith.constant 0 : index
    %c0_6 = arith.constant 0 : index
    %c0_7 = arith.constant 0 : index
    %c0_8 = arith.constant 0 : index
    %2 = vector.load %arg3[%c0_4, %c0_5, %c0_6, %c0_7, %c0_8] : memref<1x8x1x8x8xf32, #tpu.memory_space<vmem>>, vector<1x8x1x8x8xf32>
    %3 = vector.shape_cast %2 : vector<1x8x1x8x8xf32> to vector<8x8x8xf32>
    %cst = arith.constant dense<0.000000e+00> : vector<8x8xf32>
    %4 = vector.multi_reduction <add>, %1, %cst [2] : vector<8x8x8xf32> to vector<8x8xf32>
    %5 = vector.shape_cast %4 : vector<8x8xf32> to vector<8x8x1xf32>
    %cst_9 = arith.constant dense<0.000000e+00> : vector<8x8xf32>
    %6 = vector.multi_reduction <add>, %3, %cst_9 [2] : vector<8x8x8xf32> to vector<8x8xf32>
    %7 = vector.shape_cast %6 : vector<8x8xf32> to vector<8x8x1xf32>
    %8 = arith.addf %5, %7 : vector<8x8x1xf32>
    %9 = arith.mulf %1, %1 : vector<8x8x8xf32>
    %cst_10 = arith.constant dense<0.000000e+00> : vector<8x8xf32>
    %10 = vector.multi_reduction <add>, %9, %cst_10 [2] : vector<8x8x8xf32> to vector<8x8xf32>
    %11 = vector.shape_cast %10 : vector<8x8xf32> to vector<8x8x1xf32>
    %12 = arith.mulf %3, %3 : vector<8x8x8xf32>
    %cst_11 = arith.constant dense<0.000000e+00> : vector<8x8xf32>
    %13 = vector.multi_reduction <add>, %12, %cst_11 [2] : vector<8x8x8xf32> to vector<8x8xf32>
    %14 = vector.shape_cast %13 : vector<8x8xf32> to vector<8x8x1xf32>
    %15 = arith.addf %11, %14 : vector<8x8x1xf32>
    %cst_12 = arith.constant 6.250000e-02 : f32
    %16 = vector.broadcast %cst_12 : f32 to vector<8x8x1xf32>
    %17 = arith.mulf %8, %16 : vector<8x8x1xf32>
    %cst_13 = arith.constant 6.250000e-02 : f32
    %18 = vector.broadcast %cst_13 : f32 to vector<8x8x1xf32>
    %19 = arith.mulf %15, %18 : vector<8x8x1xf32>
    %20 = arith.mulf %17, %17 : vector<8x8x1xf32>
    %21 = arith.subf %19, %20 : vector<8x8x1xf32>
    %cst_14 = arith.constant 0.000000e+00 : f32
    %22 = vector.broadcast %cst_14 : f32 to vector<8x8x1xf32>
    %23 = arith.maximumf %21, %22 : vector<8x8x1xf32>
    %cst_15 = arith.constant 9.99999974E-6 : f32
    %24 = vector.broadcast %cst_15 : f32 to vector<8x8x1xf32>
    %25 = arith.addf %23, %24 : vector<8x8x1xf32>
    %26 = math.rsqrt %25 : vector<8x8x1xf32>
    %27 = vector.broadcast %17 : vector<8x8x1xf32> to vector<8x8x8xf32>
    %28 = arith.subf %1, %27 : vector<8x8x8xf32>
    %29 = vector.broadcast %26 : vector<8x8x1xf32> to vector<8x8x8xf32>
    %30 = arith.mulf %28, %29 : vector<8x8x8xf32>
    %31 = vector.broadcast %17 : vector<8x8x1xf32> to vector<8x8x8xf32>
    %32 = arith.subf %3, %31 : vector<8x8x8xf32>
    %33 = vector.broadcast %26 : vector<8x8x1xf32> to vector<8x8x8xf32>
    %34 = arith.mulf %32, %33 : vector<8x8x8xf32>
    %35 = vector.shape_cast %30 : vector<8x8x8xf32> to vector<64x8xf32>
    %c0_16 = arith.constant 0 : index
    %c0_17 = arith.constant 0 : index
    %36 = vector.load %arg4[%c0_16, %c0_17] : memref<8x8xf32, #tpu.memory_space<vmem>>, vector<8x8xf32>
    %cst_18 = arith.constant dense<0.000000e+00> : vector<64x8xf32>
    %37 = tpu.matmul %35, %36, %cst_18 {dimension_numbers = #tpu.dot_dimension_numbers<[1], [0], [0], [1], [0, 0, 1, 1], [], []>} : vector<64x8xf32>, vector<8x8xf32>, vector<64x8xf32> -> vector<64x8xf32>
    %38 = vector.shape_cast %34 : vector<8x8x8xf32> to vector<64x8xf32>
    %c0_19 = arith.constant 0 : index
    %c0_20 = arith.constant 0 : index
    %39 = vector.load %arg5[%c0_19, %c0_20] : memref<8x8xf32, #tpu.memory_space<vmem>>, vector<8x8xf32>
    %cst_21 = arith.constant dense<0.000000e+00> : vector<64x8xf32>
    %40 = tpu.matmul %38, %39, %cst_21 {dimension_numbers = #tpu.dot_dimension_numbers<[1], [0], [0], [1], [0, 0, 1, 1], [], []>} : vector<64x8xf32>, vector<8x8xf32>, vector<64x8xf32> -> vector<64x8xf32>
    %41 = arith.addf %37, %40 : vector<64x8xf32>
    %c0_22 = arith.constant 0 : index
    %c0_23 = arith.constant 0 : index
    %42 = vector.load %arg6[%c0_22, %c0_23] : memref<1x8xf32, #tpu.memory_space<vmem>>, vector<1x8xf32>
    %43 = vector.broadcast %42 : vector<1x8xf32> to vector<64x8xf32>
    %44 = arith.addf %41, %43 : vector<64x8xf32>
    %45 = vector.shape_cast %44 : vector<64x8xf32> to vector<8x8x8xf32>
    %c0_24 = arith.constant 0 : index
    %c0_25 = arith.constant 0 : index
    %c0_26 = arith.constant 0 : index
    %c0_27 = arith.constant 0 : index
    %46 = vector.load %arg7[%c0_24, %c0_25, %c0_26, %c0_27] : memref<1x8x8x8xf32, #tpu.memory_space<vmem>>, vector<1x8x8x8xf32>
    %47 = vector.shape_cast %46 : vector<1x8x8x8xf32> to vector<8x8x8xf32>
    %48 = vector.shape_cast %45 : vector<8x8x8xf32> to vector<1x8x8x8xf32>
    tpu.vector_store %arg7[%c0_24, %c0_25, %c0_26, %c0_27], %48 {strides = array<i32>} : memref<1x8x8x8xf32, #tpu.memory_space<vmem>>, vector<1x8x8x8xf32>,
    return
  }
  func.func @transform_0(%arg0: i32, %arg1: i32) -> (i32, i32, i32, i32, i32) {
    %c0_i32 = arith.constant 0 : i32
    %c0_i32_0 = arith.constant 0 : i32
    %c0_i32_1 = arith.constant 0 : i32
    %c0_i32_2 = arith.constant 0 : i32
    return %arg0, %arg1, %c0_i32, %c0_i32_0, %c0_i32_1 : i32, i32, i32, i32, i32
  }
  func.func @transform_1(%arg0: i32, %arg1: i32) -> (i32, i32, i32, i32, i32) {
    %c1_i32 = arith.constant 1 : i32
    %c0_i32 = arith.constant 0 : i32
    %c0_i32_0 = arith.constant 0 : i32
    %c0_i32_1 = arith.constant 0 : i32
    return %arg0, %arg1, %c1_i32, %c0_i32, %c0_i32_0 : i32, i32, i32, i32, i32
  }
  func.func @transform_2(%arg0: i32, %arg1: i32) -> (i32, i32) {
    %c0_i32 = arith.constant 0 : i32
    %c0_i32_0 = arith.constant 0 : i32
    %c0_i32_1 = arith.constant 0 : i32
    return %c0_i32, %c0_i32_0 : i32, i32
  }
  func.func @transform_3(%arg0: i32, %arg1: i32) -> (i32, i32) {
    %c0_i32 = arith.constant 0 : i32
    %c0_i32_0 = arith.constant 0 : i32
    %c0_i32_1 = arith.constant 0 : i32
    return %c0_i32, %c0_i32_0 : i32, i32
  }
  func.func @transform_4(%arg0: i32, %arg1: i32) -> (i32, i32) {
    %c0_i32 = arith.constant 0 : i32
    %c0_i32_0 = arith.constant 0 : i32
    %c0_i32_1 = arith.constant 0 : i32
    return %c0_i32, %c0_i32_0 : i32, i32
  }
  func.func @transform_5(%arg0: i32, %arg1: i32) -> (i32, i32, i32, i32) {
    %c0_i32 = arith.constant 0 : i32
    %c0_i32_0 = arith.constant 0 : i32
    %c0_i32_1 = arith.constant 0 : i32
    return %arg0, %arg1, %c0_i32, %c0_i32_0 : i32, i32, i32, i32
  }
}

</mosaic_0001>

<llo_original>
// kernel: patch_merging_forward.1
$region0: #{patch_merging_forward.1}
  #allocation0 [shape = 'u32[]', space=smem, size = 0x4, offset = 0x4, fixed_abs, tag = 'smem constant byte address 0x4 - core index']
  #allocation1 [shape = 'u32[72,128]{1,0:T(1,128)}', space=vmem, size = 0x9000, scoped, tag = 'internal scratch']
  %s0 = inlined_call_operand.vmem [shape: f32[2,8,2,8,8], index: 0, kind: input, shape index: {}, may-alias: {0,1}]
  %s1 = inlined_call_operand.vmem [shape: f32[2,8,2,8,8], index: 1, kind: input, shape index: {}, may-alias: {0,1}]
  %s2 = inlined_call_operand.vmem [shape: f32[8,8], index: 2, kind: input, shape index: {}]
  %s3 = inlined_call_operand.vmem [shape: f32[8,8], index: 3, kind: input, shape index: {}]
  %s4 = inlined_call_operand.vmem [shape: f32[1,8], index: 4, kind: input, shape index: {}]
  %s5 = inlined_call_operand.vmem [shape: f32[2,8,8,8], index: 5, kind: output, shape index: {}]
  %s6 = sld [smem:[#allocation0]]
  $region129: #{patch_merging_forward.1} parent=0
    _
  %s8 = ssub.s32 1, %s6
  %s9 = scalar_select 0, %s8, %s6
  $region1: #{patch_merging_forward.1} parent=0
    #allocation2 [shape = 'u8[65536]{0}', space=vmem, size = 0x10000, scoped, tag = 'input window, operand 0']
    #allocation3 [shape = 'u8[65536]{0}', space=vmem, size = 0x10000, scoped, tag = 'input window, operand 1']
    loop: start=0, step=1, limit=4
    $region2: #{patch_merging_forward.1} parent=1 // loop_pre_header
      _
    $region3: #{patch_merging_forward.1} parent=1 // loop_header
      %s11 = sphi 0, %s15
      %p12 = scmp.ge.s32.totalorder %s11, 4
      %s18 = sphi 0, %s30
      %s19 = sphi 0, %s26
      %s20 = sphi 0, %s18
      %s21 = sphi 0, %s19
      %s22 = sphi 0, %s20
      %s23 = sphi 0, %s21
      %s35 = sphi 0, %s37
      %s38 = sphi 0, %s35
      %s39 = sphi 0, %s38
      %s55 = sphi 0, %s39
      %s63 = sphi 0, %s65
      %s66 = sphi 0, %s63
      %s67 = sphi 0, %s66
      %s83 = sphi 0, %s67
      %s87 = sphi 0, %s87
      %s89 = sphi 0, %s87
      %s90 = sphi 0, %s89
      %s104 = sphi 0, %s90
      %s108 = sphi 0, %s108
      %s110 = sphi 0, %s108
      %s111 = sphi 0, %s110
      %s125 = sphi 0, %s111
      %s129 = sphi 0, %s129
      %s131 = sphi 0, %s129
      %s132 = sphi 0, %s131
      %s146 = sphi 0, %s132
      %s154 = sphi 0, %s156
      %s157 = sphi 0, %s154
      %s158 = sphi 0, %s157
      %s174 = sphi 0, %s158
    $region4: #{patch_merging_forward.1} parent=1 // loop_header_branch
      %14 = sbr.rel (%p12) target = $region8
    $region5: #{patch_merging_forward.1} parent=1 // loop_body
      %s16 = ssub.s32 %s11, 1
      %s17 = ssub.s32 %s11, 2
      %s24 = sadd.s32 1, %s19
      %p25 = scmp.ge.s32.totalorder %s24, 1
      %s26 = scalar_select %p25, 0, %s24
      %s27 = sadd.s32 1, %s18
      %s28 = scalar_select %p25, %s27, %s18
      %p29 = scmp.ge.s32.totalorder %s28, 2
      %s30 = scalar_select %p29, 0, %s28
      %s31 = ssub.s32 %s18, %s30
      %s32 = ssub.s32 %s19, %s26
      %s33 = sor.u32 %s31, %s32
      %p34 = scmp.eq.s32.totalorder %s33, 0
      %s36 = sadd.s32 %s35, 1
      %s37 = scalar_select %p34, %s35, %s36
      %p40 = pneg %p34
      %p41 = scmp.eq.s32.totalorder %s11, 1
      %p42 = por %p40, %p41
      %p43 = scmp.ne.s32.totalorder %s35, %s38
      %p44 = scmp.eq.s32.totalorder %s11, 0
      %p45 = por %p43, %p44
      %p46 = scmp.ne.s32.totalorder %s35, %s38
      %p47 = scmp.eq.s32.totalorder %s16, 1
      %p48 = por %p46, %p47
      %p49 = scmp.ne.s32.totalorder %s38, %s39
      %p50 = scmp.eq.s32.totalorder %s16, 0
      %p51 = por %p49, %p50
      %p52 = scmp.ne.s32.totalorder %s38, %s39
      %p53 = scmp.eq.s32.totalorder %s17, 1
      %p54 = por %p52, %p53
      %p56 = scmp.ne.s32.totalorder %s39, %s55
      %p57 = scmp.eq.s32.totalorder %s17, 0
      %p58 = por %p56, %p57
      %s59 = ssub.s32 %s18, %s30
      %s60 = ssub.s32 %s19, %s26
      %s61 = sor.u32 %s59, %s60
      %p62 = scmp.eq.s32.totalorder %s61, 0
      %s64 = sadd.s32 %s63, 1
      %s65 = scalar_select %p62, %s63, %s64
      %p68 = pneg %p62
      %p69 = scmp.eq.s32.totalorder %s11, 1
      %p70 = por %p68, %p69
      %p71 = scmp.ne.s32.totalorder %s63, %s66
      %p72 = scmp.eq.s32.totalorder %s11, 0
      %p73 = por %p71, %p72
      %p74 = scmp.ne.s32.totalorder %s63, %s66
      %p75 = scmp.eq.s32.totalorder %s16, 1
      %p76 = por %p74, %p75
      %p77 = scmp.ne.s32.totalorder %s66, %s67
      %p78 = scmp.eq.s32.totalorder %s16, 0
      %p79 = por %p77, %p78
      %p80 = scmp.ne.s32.totalorder %s66, %s67
      %p81 = scmp.eq.s32.totalorder %s17, 1
      %p82 = por %p80, %p81
      %p84 = scmp.ne.s32.totalorder %s67, %s83
      %p85 = scmp.eq.s32.totalorder %s17, 0
      %p86 = por %p84, %p85
      %s88 = sadd.s32 %s87, 1
      %p91 = scmp.eq.s32.totalorder %s11, 1
      %p92 = scmp.ne.s32.totalorder %s87, %s89
      %p93 = scmp.eq.s32.totalorder %s11, 0
      %p94 = por %p92, %p93
      %p95 = scmp.ne.s32.totalorder %s87, %s89
      %p96 = scmp.eq.s32.totalorder %s16, 1
      %p97 = por %p95, %p96
      %p98 = scmp.ne.s32.totalorder %s89, %s90
      %p99 = scmp.eq.s32.totalorder %s16, 0
      %p100 = por %p98, %p99
      %p101 = scmp.ne.s32.totalorder %s89, %s90
      %p102 = scmp.eq.s32.totalorder %s17, 1
      %p103 = por %p101, %p102
      %p105 = scmp.ne.s32.totalorder %s90, %s104
      %p106 = scmp.eq.s32.totalorder %s17, 0
      %p107 = por %p105, %p106
      %s109 = sadd.s32 %s108, 1
      %p112 = scmp.eq.s32.totalorder %s11, 1
      %p113 = scmp.ne.s32.totalorder %s108, %s110
      %p114 = scmp.eq.s32.totalorder %s11, 0
      %p115 = por %p113, %p114
      %p116 = scmp.ne.s32.totalorder %s108, %s110
      %p117 = scmp.eq.s32.totalorder %s16, 1
      %p118 = por %p116, %p117
      %p119 = scmp.ne.s32.totalorder %s110, %s111
      %p120 = scmp.eq.s32.totalorder %s16, 0
      %p121 = por %p119, %p120
      %p122 = scmp.ne.s32.totalorder %s110, %s111
      %p123 = scmp.eq.s32.totalorder %s17, 1
      %p124 = por %p122, %p123
      %p126 = scmp.ne.s32.totalorder %s111, %s125
      %p127 = scmp.eq.s32.totalorder %s17, 0
      %p128 = por %p126, %p127
      %s130 = sadd.s32 %s129, 1
      %p133 = scmp.eq.s32.totalorder %s11, 1
      %p134 = scmp.ne.s32.totalorder %s129, %s131
      %p135 = scmp.eq.s32.totalorder %s11, 0
      %p136 = por %p134, %p135
      %p137 = scmp.ne.s32.totalorder %s129, %s131
      %p138 = scmp.eq.s32.totalorder %s16, 1
      %p139 = por %p137, %p138
      %p140 = scmp.ne.s32.totalorder %s131, %s132
      %p141 = scmp.eq.s32.totalorder %s16, 0
      %p142 = por %p140, %p141
      %p143 = scmp.ne.s32.totalorder %s131, %s132
      %p144 = scmp.eq.s32.totalorder %s17, 1
      %p145 = por %p143, %p144
      %p147 = scmp.ne.s32.totalorder %s132, %s146
      %p148 = scmp.eq.s32.totalorder %s17, 0
      %p149 = por %p147, %p148
      %s150 = ssub.s32 %s18, %s30
      %s151 = ssub.s32 %s19, %s26
      %s152 = sor.u32 %s150, %s151
      %p153 = scmp.eq.s32.totalorder %s152, 0
      %s155 = sadd.s32 %s154, 1
      %s156 = scalar_select %p153, %s154, %s155
      %p159 = pneg %p153
      %p160 = scmp.eq.s32.totalorder %s11, 1
      %p161 = por %p159, %p160
      %p162 = scmp.ne.s32.totalorder %s154, %s157
      %p163 = scmp.eq.s32.totalorder %s11, 0
      %p164 = por %p162, %p163
      %p165 = scmp.ne.s32.totalorder %s154, %s157
      %p166 = scmp.eq.s32.totalorder %s16, 1
      %p167 = por %p165, %p166
      %p168 = scmp.ne.s32.totalorder %s157, %s158
      %p169 = scmp.eq.s32.totalorder %s16, 0
      %p170 = por %p168, %p169
      %p171 = scmp.ne.s32.totalorder %s157, %s158
      %p172 = scmp.eq.s32.totalorder %s17, 1
      %p173 = por %p171, %p172
      %p175 = scmp.ne.s32.totalorder %s158, %s174
      %p176 = scmp.eq.s32.totalorder %s17, 0
      %p177 = por %p175, %p176
      %p178 = scmp.le.s32.totalorder 1, %s11
      %p179 = scmp.lt.s32.totalorder %s11, 3
      %p180 = pnand %p178, %p179
      %p181 = pneg %p180
      // Predicated region
      $region9: #{patch_merging_forward.1} parent=5 // pred_check
        _
      $region10: #{patch_merging_forward.1} parent=5 // pred_check_branch
        %183 = sbr.rel (%p180) target = $region12
      $region11: #{patch_merging_forward.1} parent=5 // pred_region
        %s184 = ssub.s32 %s11, 1
        // Predicated region
        $region13: #{patch_merging_forward.1} parent=11 // pred_check
          %p185 = pneg %p100
        $region14: #{patch_merging_forward.1} parent=11 // pred_check_branch
          %187 = sbr.rel (%p185) target = $region16
        $region15: #{patch_merging_forward.1} parent=11 // pred_region
          _
        $region16: #{patch_merging_forward.1} parent=11 // pred_fallthru
          _
        // Predicated region
        $region17: #{patch_merging_forward.1} parent=11 // pred_check
          %p188 = pneg %p121
        $region18: #{patch_merging_forward.1} parent=11 // pred_check_branch
          %190 = sbr.rel (%p188) target = $region20
        $region19: #{patch_merging_forward.1} parent=11 // pred_region
          _
        $region20: #{patch_merging_forward.1} parent=11 // pred_fallthru
          _
        // Predicated region
        $region21: #{patch_merging_forward.1} parent=11 // pred_check
          %p191 = pneg %p142
        $region22: #{patch_merging_forward.1} parent=11 // pred_check_branch
          %193 = sbr.rel (%p191) target = $region24
        $region23: #{patch_merging_forward.1} parent=11 // pred_region
          _
        $region24: #{patch_merging_forward.1} parent=11 // pred_fallthru
          _
      $region12: #{patch_merging_forward.1} parent=5 // pred_fallthru
        _
      %p194 = scmp.lt.s32.totalorder %s11, 2
      // Predicated region
      $region25: #{patch_merging_forward.1} parent=5 // pred_check
        %p195 = pneg %p194
      $region26: #{patch_merging_forward.1} parent=5 // pred_check_branch
        %197 = sbr.rel (%p195) target = $region28
      $region27: #{patch_merging_forward.1} parent=5 // pred_region
        // Predicated region
        $region29: #{patch_merging_forward.1} parent=27 // pred_check
          %p198 = pneg %p45
        $region30: #{patch_merging_forward.1} parent=27 // pred_check_branch
          %200 = sbr.rel (%p198) target = $region32
        $region31: #{patch_merging_forward.1} parent=27 // pred_region
          %s201 = sand.u32 %s35, 1
          %s202 = sand.u32 %s35, 1
          %s203 = smul.addr %s202, 64
          %s204 = scalar_lea.vmem [#allocation2], %s203
          %s205 = smul.u32 8, %s19
          %s206 = smul.addr %s205, 2
          %s207 = smul.addr %s18, 16
          %s208 = sadd.s32 %s206, %s207
          %s209 = smul.addr %s208, 8
          %s210 = scalar_lea.vmem %s0, %s209
          // Predicated region
          $region33: #{patch_merging_forward.1} parent=31 // pred_check
            _
          $region34: #{patch_merging_forward.1} parent=31 // pred_check_branch
            %212 = sbr.rel (0) target = $region36
          $region35: #{patch_merging_forward.1} parent=31 // pred_region
            // Predicated region
            $region37: #{patch_merging_forward.1} parent=35 // pred_check
              _
            $region38: #{patch_merging_forward.1} parent=35 // pred_check_branch
              %214 = sbr.rel (0) target = $region40
            $region39: #{patch_merging_forward.1} parent=35 // pred_region
              // Predicated region
              $region52: #{patch_merging_forward.1} parent=39 // pred_check
                _
              $region53: #{patch_merging_forward.1} parent=39 // pred_check_branch
                %244 = sbr.rel (0) target = $region55
              $region54: #{patch_merging_forward.1} parent=39 // pred_region
                loop: start=0, step=1, limit=1
                $region56: #{patch_merging_forward.1} parent=54 // loop_pre_header
                  _
                $region57: #{patch_merging_forward.1} parent=54 // loop_header
                  %s246 = sphi 0, %s250
                  %p247 = scmp.ge.s32.totalorder %s246, 1
                  %s251 = sphi %s210, %s210
                  %s252 = sphi %s204, %s204
                $region58: #{patch_merging_forward.1} parent=54 // loop_header_branch
                  %249 = sbr.rel (%p247) target = $region62
                $region59: #{patch_merging_forward.1} parent=54 // loop_body
                  %v253 = vld [vmem:[%s251] sm:$0xff]
                  %254 = vst [vmem:[%s252] sm:$0xff] %v253
                  %v255 = vld [vmem:[%s251 + $0x10] sm:$0xff]
                  %256 = vst [vmem:[%s252 + $0x8] sm:$0xff] %v255
                  %v257 = vld [vmem:[%s251 + $0x20] sm:$0xff]
                  %258 = vst [vmem:[%s252 + $0x10] sm:$0xff] %v257
                  %v259 = vld [vmem:[%s251 + $0x30] sm:$0xff]
                  %260 = vst [vmem:[%s252 + $0x18] sm:$0xff] %v259
                  %v261 = vld [vmem:[%s251 + $0x40] sm:$0xff]
                  %262 = vst [vmem:[%s252 + $0x20] sm:$0xff] %v261
                  %v263 = vld [vmem:[%s251 + $0x50] sm:$0xff]
                  %264 = vst [vmem:[%s252 + $0x28] sm:$0xff] %v263
                  %v265 = vld [vmem:[%s251 + $0x60] sm:$0xff]
                  %266 = vst [vmem:[%s252 + $0x30] sm:$0xff] %v265
                  %v267 = vld [vmem:[%s251 + $0x70] sm:$0xff]
                  %268 = vst [vmem:[%s252 + $0x38] sm:$0xff] %v267
                $region60: #{patch_merging_forward.1} parent=54 // loop_footer
                  %s250 = sadd.s32 1, %s246
                $region61: #{patch_merging_forward.1} parent=54 // loop_footer_branch
                  %245 = sbr.rel target = $region57
                $region62: #{patch_merging_forward.1} parent=54 // loop_exit
                  _
              $region55: #{patch_merging_forward.1} parent=39 // pred_fallthru
                _
              // Predicated region
              $region63: #{patch_merging_forward.1} parent=39 // pred_check
                _
              $region64: #{patch_merging_forward.1} parent=39 // pred_check_branch
                %270 = sbr.rel target = $region66
              $region65: #{patch_merging_forward.1} parent=39 // pred_region
                _
              $region66: #{patch_merging_forward.1} parent=39 // pred_fallthru
                _
            $region40: #{patch_merging_forward.1} parent=35 // pred_fallthru
              _
            // Predicated region
            $region41: #{patch_merging_forward.1} parent=35 // pred_check
              _
            $region42: #{patch_merging_forward.1} parent=35 // pred_check_branch
              %216 = sbr.rel target = $region44
            $region43: #{patch_merging_forward.1} parent=35 // pred_region
              %s218 = ssub.s32 256, 1
              loop: start=0, step=1, limit=1
              $region45: #{patch_merging_forward.1} parent=43 // loop_pre_header
                _
              $region46: #{patch_merging_forward.1} parent=43 // loop_header
                %s220 = sphi 0, %s224
                %p221 = scmp.ge.s32.totalorder %s220, 1
                %s225 = sphi %s210, %s210
                %s226 = sphi %s204, %s204
              $region47: #{patch_merging_forward.1} parent=43 // loop_header_branch
                %223 = sbr.rel (%p221) target = $region51
              $region48: #{patch_merging_forward.1} parent=43 // loop_body
                %v227 = vld [vmem:[%s225] sm:%s218]
                %228 = vst [vmem:[%s226] sm:%s218] %v227
                %v229 = vld [vmem:[%s225 + $0x10] sm:%s218]
                %230 = vst [vmem:[%s226 + $0x8] sm:%s218] %v229
                %v231 = vld [vmem:[%s225 + $0x20] sm:%s218]
                %232 = vst [vmem:[%s226 + $0x10] sm:%s218] %v231
                %v233 = vld [vmem:[%s225 + $0x30] sm:%s218]
                %234 = vst [vmem:[%s226 + $0x18] sm:%s218] %v233
                %v235 = vld [vmem:[%s225 + $0x40] sm:%s218]
                %236 = vst [vmem:[%s226 + $0x20] sm:%s218] %v235
                %v237 = vld [vmem:[%s225 + $0x50] sm:%s218]
                %238 = vst [vmem:[%s226 + $0x28] sm:%s218] %v237
                %v239 = vld [vmem:[%s225 + $0x60] sm:%s218]
                %240 = vst [vmem:[%s226 + $0x30] sm:%s218] %v239
                %v241 = vld [vmem:[%s225 + $0x70] sm:%s218]
                %242 = vst [vmem:[%s226 + $0x38] sm:%s218] %v241
              $region49: #{patch_merging_forward.1} parent=43 // loop_footer
                %s224 = sadd.s32 1, %s220
              $region50: #{patch_merging_forward.1} parent=43 // loop_footer_branch
                %219 = sbr.rel target = $region46
              $region51: #{patch_merging_forward.1} parent=43 // loop_exit
                _
            $region44: #{patch_merging_forward.1} parent=35 // pred_fallthru
              _
          $region36: #{patch_merging_forward.1} parent=31 // pred_fallthru
            _
          %271 = vnop
        $region32: #{patch_merging_forward.1} parent=27 // pred_fallthru
          _
        // Predicated region
        $region67: #{patch_merging_forward.1} parent=27 // pred_check
          %p272 = pneg %p73
        $region68: #{patch_merging_forward.1} parent=27 // pred_check_branch
          %274 = sbr.rel (%p272) target = $region70
        $region69: #{patch_merging_forward.1} parent=27 // pred_region
          %s275 = sand.u32 %s63, 1
          %s276 = sand.u32 %s63, 1
          %s277 = smul.addr %s276, 64
          %s278 = scalar_lea.vmem [#allocation3], %s277
          %s279 = smul.u32 8, %s19
          %s280 = smul.addr %s279, 2
          %s281 = sadd.s32 1, %s280
          %s282 = smul.addr %s18, 16
          %s283 = sadd.s32 %s281, %s282
          %s284 = smul.addr %s283, 8
          %s285 = scalar_lea.vmem %s1, %s284
          // Predicated region
          $region71: #{patch_merging_forward.1} parent=69 // pred_check
            _
          $region72: #{patch_merging_forward.1} parent=69 // pred_check_branch
            %287 = sbr.rel (0) target = $region74
          $region73: #{patch_merging_forward.1} parent=69 // pred_region
            // Predicated region
            $region75: #{patch_merging_forward.1} parent=73 // pred_check
              _
            $region76: #{patch_merging_forward.1} parent=73 // pred_check_branch
              %289 = sbr.rel (0) target = $region78
            $region77: #{patch_merging_forward.1} parent=73 // pred_region
              // Predicated region
              $region90: #{patch_merging_forward.1} parent=77 // pred_check
                _
              $region91: #{patch_merging_forward.1} parent=77 // pred_check_branch
                %319 = sbr.rel (0) target = $region93
              $region92: #{patch_merging_forward.1} parent=77 // pred_region
                loop: start=0, step=1, limit=1
                $region94: #{patch_merging_forward.1} parent=92 // loop_pre_header
                  _
                $region95: #{patch_merging_forward.1} parent=92 // loop_header
                  %s321 = sphi 0, %s325
                  %p322 = scmp.ge.s32.totalorder %s321, 1
                  %s326 = sphi %s285, %s285
                  %s327 = sphi %s278, %s278
                $region96: #{patch_merging_forward.1} parent=92 // loop_header_branch
                  %324 = sbr.rel (%p322) target = $region100
                $region97: #{patch_merging_forward.1} parent=92 // loop_body
                  %v328 = vld [vmem:[%s326] sm:$0xff]
                  %329 = vst [vmem:[%s327] sm:$0xff] %v328
                  %v330 = vld [vmem:[%s326 + $0x10] sm:$0xff]
                  %331 = vst [vmem:[%s327 + $0x8] sm:$0xff] %v330
                  %v332 = vld [vmem:[%s326 + $0x20] sm:$0xff]
                  %333 = vst [vmem:[%s327 + $0x10] sm:$0xff] %v332
                  %v334 = vld [vmem:[%s326 + $0x30] sm:$0xff]
                  %335 = vst [vmem:[%s327 + $0x18] sm:$0xff] %v334
                  %v336 = vld [vmem:[%s326 + $0x40] sm:$0xff]
                  %337 = vst [vmem:[%s327 + $0x20] sm:$0xff] %v336
                  %v338 = vld [vmem:[%s326 + $0x50] sm:$0xff]
                  %339 = vst [vmem:[%s327 + $0x28] sm:$0xff] %v338
                  %v340 = vld [vmem:[%s326 + $0x60] sm:$0xff]
                  %341 = vst [vmem:[%s327 + $0x30] sm:$0xff] %v340
                  %v342 = vld [vmem:[%s326 + $0x70] sm:$0xff]
                  %343 = vst [vmem:[%s327 + $0x38] sm:$0xff] %v342
                $region98: #{patch_merging_forward.1} parent=92 // loop_footer
                  %s325 = sadd.s32 1, %s321
                $region99: #{patch_merging_forward.1} parent=92 // loop_footer_branch
                  %320 = sbr.rel target = $region95
                $region100: #{patch_merging_forward.1} parent=92 // loop_exit
                  _
              $region93: #{patch_merging_forward.1} parent=77 // pred_fallthru
                _
              // Predicated region
              $region101: #{patch_merging_forward.1} parent=77 // pred_check
                _
              $region102: #{patch_merging_forward.1} parent=77 // pred_check_branch
                %345 = sbr.rel target = $region104
              $region103: #{patch_merging_forward.1} parent=77 // pred_region
                _
              $region104: #{patch_merging_forward.1} parent=77 // pred_fallthru
                _
            $region78: #{patch_merging_forward.1} parent=73 // pred_fallthru
              _
            // Predicated region
            $region79: #{patch_merging_forward.1} parent=73 // pred_check
              _
            $region80: #{patch_merging_forward.1} parent=73 // pred_check_branch
              %291 = sbr.rel target = $region82
            $region81: #{patch_merging_forward.1} parent=73 // pred_region
              %s293 = ssub.s32 256, 1
              loop: start=0, step=1, limit=1
              $region83: #{patch_merging_forward.1} parent=81 // loop_pre_header
                _
              $region84: #{patch_merging_forward.1} parent=81 // loop_header
                %s295 = sphi 0, %s299
                %p296 = scmp.ge.s32.totalorder %s295, 1
                %s300 = sphi %s285, %s285
                %s301 = sphi %s278, %s278
              $region85: #{patch_merging_forward.1} parent=81 // loop_header_branch
                %298 = sbr.rel (%p296) target = $region89
              $region86: #{patch_merging_forward.1} parent=81 // loop_body
                %v302 = vld [vmem:[%s300] sm:%s293]
                %303 = vst [vmem:[%s301] sm:%s293] %v302
                %v304 = vld [vmem:[%s300 + $0x10] sm:%s293]
                %305 = vst [vmem:[%s301 + $0x8] sm:%s293] %v304
                %v306 = vld [vmem:[%s300 + $0x20] sm:%s293]
                %307 = vst [vmem:[%s301 + $0x10] sm:%s293] %v306
                %v308 = vld [vmem:[%s300 + $0x30] sm:%s293]
                %309 = vst [vmem:[%s301 + $0x18] sm:%s293] %v308
                %v310 = vld [vmem:[%s300 + $0x40] sm:%s293]
                %311 = vst [vmem:[%s301 + $0x20] sm:%s293] %v310
                %v312 = vld [vmem:[%s300 + $0x50] sm:%s293]
                %313 = vst [vmem:[%s301 + $0x28] sm:%s293] %v312
                %v314 = vld [vmem:[%s300 + $0x60] sm:%s293]
                %315 = vst [vmem:[%s301 + $0x30] sm:%s293] %v314
                %v316 = vld [vmem:[%s300 + $0x70] sm:%s293]
                %317 = vst [vmem:[%s301 + $0x38] sm:%s293] %v316
              $region87: #{patch_merging_forward.1} parent=81 // loop_footer
                %s299 = sadd.s32 1, %s295
              $region88: #{patch_merging_forward.1} parent=81 // loop_footer_branch
                %294 = sbr.rel target = $region84
              $region89: #{patch_merging_forward.1} parent=81 // loop_exit
                _
            $region82: #{patch_merging_forward.1} parent=73 // pred_fallthru
              _
          $region74: #{patch_merging_forward.1} parent=69 // pred_fallthru
            _
          %346 = vnop
        $region70: #{patch_merging_forward.1} parent=27 // pred_fallthru
          _
      $region28: #{patch_merging_forward.1} parent=5 // pred_fallthru
        _
      %p347 = scmp.le.s32.totalorder 1, %s11
      %p348 = scmp.lt.s32.totalorder %s11, 3
      %p349 = pnand %p347, %p348
      %p350 = pneg %p349
      // Predicated region
      $region105: #{patch_merging_forward.1} parent=5 // pred_check
        _
      $region106: #{patch_merging_forward.1} parent=5 // pred_check_branch
        %352 = sbr.rel (%p349) target = $region108
      $region107: #{patch_merging_forward.1} parent=5 // pred_region
        %s353 = ssub.s32 %s11, 1
        %s354 = sand.u32 %s38, 1
        %s355 = sand.u32 %s38, 1
        %s356 = smul.addr %s355, 64
        %s357 = scalar_lea.vmem [#allocation2], %s356
        // Predicated region
        $region109: #{patch_merging_forward.1} parent=107 // pred_check
          %p358 = pneg %p51
        $region110: #{patch_merging_forward.1} parent=107 // pred_check_branch
          %360 = sbr.rel (%p358) target = $region112
        $region111: #{patch_merging_forward.1} parent=107 // pred_region
          _
        $region112: #{patch_merging_forward.1} parent=107 // pred_fallthru
          _
        %s361 = sand.u32 %s66, 1
        %s362 = sand.u32 %s66, 1
        %s363 = smul.addr %s362, 64
        %s364 = scalar_lea.vmem [#allocation3], %s363
        // Predicated region
        $region113: #{patch_merging_forward.1} parent=107 // pred_check
          %p365 = pneg %p79
        $region114: #{patch_merging_forward.1} parent=107 // pred_check_branch
          %367 = sbr.rel (%p365) target = $region116
        $region115: #{patch_merging_forward.1} parent=107 // pred_region
          _
        $region116: #{patch_merging_forward.1} parent=107 // pred_fallthru
          _
        %s368 = sand.u32 %s38, 1
        %s369 = sand.u32 %s38, 1
        %s370 = smul.addr %s369, 64
        %s371 = scalar_lea.vmem [#allocation2], %s370
        %p372 = pneg %p51
        %p373 = pneg %p48
        %s374 = sand.u32 %s66, 1
        %s375 = sand.u32 %s66, 1
        %s376 = smul.addr %s375, 64
        %s377 = scalar_lea.vmem [#allocation3], %s376
        %p378 = pneg %p79
        %p379 = pneg %p76
        %p380 = pneg %p100
        %p381 = pneg %p97
        %p382 = pneg %p121
        %p383 = pneg %p118
        %p384 = pneg %p142
        %p385 = pneg %p139
        %p386 = pneg %p170
        %p387 = pneg %p167
        %s388 = smul.u32 8, %s21
        %p389 = scmp.lt.s32.totalorder %s20, 1
        %s390 = scalar_select %p389, %s20, 1
        %p391 = scmp.lt.s32.totalorder %s388, 7
        %s392 = scalar_select %p391, %s388, 7
        %s393 = smul.addr %s390, 8
        %s394 = sadd.s32 %s392, %s393
        %s395 = smul.addr %s394, 8
        %s396 = scalar_lea.vmem %s5, %s395
        %s397 = smul.u32 8, %s21
        %s398 = smul.u32 8, %s21
        %s399 = smul.u32 8, %s21
        %p400 = scmp.lt.s32.totalorder %s20, 1
        %s401 = scalar_select %p400, %s20, 1
        %p402 = scmp.lt.s32.totalorder %s399, 7
        %s403 = scalar_select %p402, %s399, 7
        %s404 = smul.addr %s401, 8
        %s405 = sadd.s32 %s403, %s404
        %s406 = smul.addr %s405, 8
        %s407 = scalar_lea.vmem %s5, %s406
        %s408 = smul.u32 8, %s21
        %v409 = vld [vmem:[%s357] sm:$0xff]
        %v410 = vld [vmem:[%s357 + $0x8] sm:$0xff]
        %v411 = vld [vmem:[%s357 + $0x10] sm:$0xff]
        %v412 = vld [vmem:[%s357 + $0x18] sm:$0xff]
        %v413 = vld [vmem:[%s357 + $0x20] sm:$0xff]
        %v414 = vld [vmem:[%s357 + $0x28] sm:$0xff]
        %v415 = vld [vmem:[%s357 + $0x30] sm:$0xff]
        %v416 = vld [vmem:[%s357 + $0x38] sm:$0xff]
        %v417 = vld [vmem:[%s364] sm:$0xff]
        %v418 = vld [vmem:[%s364 + $0x8] sm:$0xff]
        %v419 = vld [vmem:[%s364 + $0x10] sm:$0xff]
        %v420 = vld [vmem:[%s364 + $0x18] sm:$0xff]
        %v421 = vld [vmem:[%s364 + $0x20] sm:$0xff]
        %v422 = vld [vmem:[%s364 + $0x28] sm:$0xff]
        %v423 = vld [vmem:[%s364 + $0x30] sm:$0xff]
        %v424 = vld [vmem:[%s364 + $0x38] sm:$0xff]
        %vm425 = vcmask 64512
        %v426 = vsel %vm425, %v409, 0.0
        %427 = vadd.xlane.f32.xlu0 %v426
        %v428 = vpop.xlane.xlu0 %427
        %v429 = vsel %vm425, %v410, 0.0
        %430 = vadd.xlane.f32.xlu0 %v429
        %v431 = vpop.xlane.xlu0 %430
        %v432 = vsel %vm425, %v411, 0.0
        %433 = vadd.xlane.f32.xlu0 %v432
        %v434 = vpop.xlane.xlu0 %433
        %v435 = vsel %vm425, %v412, 0.0
        %436 = vadd.xlane.f32.xlu0 %v435
        %v437 = vpop.xlane.xlu0 %436
        %v438 = vsel %vm425, %v413, 0.0
        %439 = vadd.xlane.f32.xlu0 %v438
        %v440 = vpop.xlane.xlu0 %439
        %v441 = vsel %vm425, %v414, 0.0
        %442 = vadd.xlane.f32.xlu0 %v441
        %v443 = vpop.xlane.xlu0 %442
        %v444 = vsel %vm425, %v415, 0.0
        %445 = vadd.xlane.f32.xlu0 %v444
        %v446 = vpop.xlane.xlu0 %445
        %v447 = vsel %vm425, %v416, 0.0
        %448 = vadd.xlane.f32.xlu0 %v447
        %v449 = vpop.xlane.xlu0 %448
        %v450 = vsel %vm425, %v417, 0.0
        %451 = vadd.xlane.f32.xlu0 %v450
        %v452 = vpop.xlane.xlu0 %451
        %v453 = vsel %vm425, %v418, 0.0
        %454 = vadd.xlane.f32.xlu0 %v453
        %v455 = vpop.xlane.xlu0 %454
        %v456 = vsel %vm425, %v419, 0.0
        %457 = vadd.xlane.f32.xlu0 %v456
        %v458 = vpop.xlane.xlu0 %457
        %v459 = vsel %vm425, %v420, 0.0
        %460 = vadd.xlane.f32.xlu0 %v459
        %v461 = vpop.xlane.xlu0 %460
        %v462 = vsel %vm425, %v421, 0.0
        %463 = vadd.xlane.f32.xlu0 %v462
        %v464 = vpop.xlane.xlu0 %463
        %v465 = vsel %vm425, %v422, 0.0
        %466 = vadd.xlane.f32.xlu0 %v465
        %v467 = vpop.xlane.xlu0 %466
        %v468 = vsel %vm425, %v423, 0.0
        %469 = vadd.xlane.f32.xlu0 %v468
        %v470 = vpop.xlane.xlu0 %469
        %v471 = vsel %vm425, %v424, 0.0
        %472 = vadd.xlane.f32.xlu0 %v471
        %v473 = vpop.xlane.xlu0 %472
        %v474 = vadd.f32 %v428, %v452
        %v475 = vadd.f32 %v431, %v455
        %v476 = vadd.f32 %v434, %v458
        %v477 = vadd.f32 %v437, %v461
        %v478 = vadd.f32 %v440, %v464
        %v479 = vadd.f32 %v443, %v467
        %v480 = vadd.f32 %v446, %v470
        %v481 = vadd.f32 %v449, %v473
        %v482 = vmul.f32 %v409, %v409
        %v483 = vmul.f32 %v410, %v410
        %v484 = vmul.f32 %v411, %v411
        %v485 = vmul.f32 %v412, %v412
        %v486 = vmul.f32 %v413, %v413
        %v487 = vmul.f32 %v414, %v414
        %v488 = vmul.f32 %v415, %v415
        %v489 = vmul.f32 %v416, %v416
        %v490 = vsel %vm425, %v482, 0.0
        %491 = vadd.xlane.f32.xlu0 %v490
        %v492 = vpop.xlane.xlu0 %491
        %v493 = vsel %vm425, %v483, 0.0
        %494 = vadd.xlane.f32.xlu0 %v493
        %v495 = vpop.xlane.xlu0 %494
        %v496 = vsel %vm425, %v484, 0.0
        %497 = vadd.xlane.f32.xlu0 %v496
        %v498 = vpop.xlane.xlu0 %497
        %v499 = vsel %vm425, %v485, 0.0
        %500 = vadd.xlane.f32.xlu0 %v499
        %v501 = vpop.xlane.xlu0 %500
        %v502 = vsel %vm425, %v486, 0.0
        %503 = vadd.xlane.f32.xlu0 %v502
        %v504 = vpop.xlane.xlu0 %503
        %v505 = vsel %vm425, %v487, 0.0
        %506 = vadd.xlane.f32.xlu0 %v505
        %v507 = vpop.xlane.xlu0 %506
        %v508 = vsel %vm425, %v488, 0.0
        %509 = vadd.xlane.f32.xlu0 %v508
        %v510 = vpop.xlane.xlu0 %509
        %v511 = vsel %vm425, %v489, 0.0
        %512 = vadd.xlane.f32.xlu0 %v511
        %v513 = vpop.xlane.xlu0 %512
        %v514 = vmul.f32 %v417, %v417
        %v515 = vmul.f32 %v418, %v418
        %v516 = vmul.f32 %v419, %v419
        %v517 = vmul.f32 %v420, %v420
        %v518 = vmul.f32 %v421, %v421
        %v519 = vmul.f32 %v422, %v422
        %v520 = vmul.f32 %v423, %v423
        %v521 = vmul.f32 %v424, %v424
        %v522 = vsel %vm425, %v514, 0.0
        %523 = vadd.xlane.f32.xlu0 %v522
        %v524 = vpop.xlane.xlu0 %523
        %v525 = vsel %vm425, %v515, 0.0
        %526 = vadd.xlane.f32.xlu0 %v525
        %v527 = vpop.xlane.xlu0 %526
        %v528 = vsel %vm425, %v516, 0.0
        %529 = vadd.xlane.f32.xlu0 %v528
        %v530 = vpop.xlane.xlu0 %529
        %v531 = vsel %vm425, %v517, 0.0
        %532 = vadd.xlane.f32.xlu0 %v531
        %v533 = vpop.xlane.xlu0 %532
        %v534 = vsel %vm425, %v518, 0.0
        %535 = vadd.xlane.f32.xlu0 %v534
        %v536 = vpop.xlane.xlu0 %535
        %v537 = vsel %vm425, %v519, 0.0
        %538 = vadd.xlane.f32.xlu0 %v537
        %v539 = vpop.xlane.xlu0 %538
        %v540 = vsel %vm425, %v520, 0.0
        %541 = vadd.xlane.f32.xlu0 %v540
        %v542 = vpop.xlane.xlu0 %541
        %v543 = vsel %vm425, %v521, 0.0
        %544 = vadd.xlane.f32.xlu0 %v543
        %v545 = vpop.xlane.xlu0 %544
        %v546 = vadd.f32 %v492, %v524
        %v547 = vadd.f32 %v495, %v527
        %v548 = vadd.f32 %v498, %v530
        %v549 = vadd.f32 %v501, %v533
        %v550 = vadd.f32 %v504, %v536
        %v551 = vadd.f32 %v507, %v539
        %v552 = vadd.f32 %v510, %v542
        %v553 = vadd.f32 %v513, %v545
        %v554 = vmul.f32 %v474, 0.0625
        %v555 = vmul.f32 %v475, 0.0625
        %v556 = vmul.f32 %v476, 0.0625
        %v557 = vmul.f32 %v477, 0.0625
        %v558 = vmul.f32 %v478, 0.0625
        %v559 = vmul.f32 %v479, 0.0625
        %v560 = vmul.f32 %v480, 0.0625
        %v561 = vmul.f32 %v481, 0.0625
        %v562 = vmul.f32 %v546, 0.0625
        %v563 = vmul.f32 %v547, 0.0625
        %v564 = vmul.f32 %v548, 0.0625
        %v565 = vmul.f32 %v549, 0.0625
        %v566 = vmul.f32 %v550, 0.0625
        %v567 = vmul.f32 %v551, 0.0625
        %v568 = vmul.f32 %v552, 0.0625
        %v569 = vmul.f32 %v553, 0.0625
        %v570 = vmul.f32 %v554, %v554
        %v571 = vmul.f32 %v555, %v555
        %v572 = vmul.f32 %v556, %v556
        %v573 = vmul.f32 %v557, %v557
        %v574 = vmul.f32 %v558, %v558
        %v575 = vmul.f32 %v559, %v559
        %v576 = vmul.f32 %v560, %v560
        %v577 = vmul.f32 %v561, %v561
        %v578 = vsub.f32 %v562, %v570
        %v579 = vsub.f32 %v563, %v571
        %v580 = vsub.f32 %v564, %v572
        %v581 = vsub.f32 %v565, %v573
        %v582 = vsub.f32 %v566, %v574
        %v583 = vsub.f32 %v567, %v575
        %v584 = vsub.f32 %v568, %v576
        %v585 = vsub.f32 %v569, %v577
        %v586 = vmax.f32 %v578, 0.0
        %v587 = vmax.f32 %v579, 0.0
        %v588 = vmax.f32 %v580, 0.0
        %v589 = vmax.f32 %v581, 0.0
        %v590 = vmax.f32 %v582, 0.0
        %v591 = vmax.f32 %v583, 0.0
        %v592 = vmax.f32 %v584, 0.0
        %v593 = vmax.f32 %v585, 0.0
        %v594 = vadd.f32 %v586, 1e-05
        %v595 = vadd.f32 %v587, 1e-05
        %v596 = vadd.f32 %v588, 1e-05
        %v597 = vadd.f32 %v589, 1e-05
        %v598 = vadd.f32 %v590, 1e-05
        %v599 = vadd.f32 %v591, 1e-05
        %v600 = vadd.f32 %v592, 1e-05
        %v601 = vadd.f32 %v593, 1e-05
        %v602 = vrsqrt.pop %v594
        %v603 = vmul.f32 %v602, %v594
        %v604 = vmul.f32 %v603, %v602
        %v605 = vmul.f32 0.5, %v604
        %v606 = vsub.f32 1.5, %v605
        %v607 = vmul.f32 %v602, %v606
        %vm608 = vweird.f32 %v594
        %vm609 = vweird.f32 %v602
        %vm610 = vmor %vm608, %vm609
        %v611 = vsel %vm610, %v602, %v607
        %v612 = vrsqrt.pop %v595
        %v613 = vmul.f32 %v612, %v595
        %v614 = vmul.f32 %v613, %v612
        %v615 = vmul.f32 0.5, %v614
        %v616 = vsub.f32 1.5, %v615
        %v617 = vmul.f32 %v612, %v616
        %vm618 = vweird.f32 %v595
        %vm619 = vweird.f32 %v612
        %vm620 = vmor %vm618, %vm619
        %v621 = vsel %vm620, %v612, %v617
        %v622 = vrsqrt.pop %v596
        %v623 = vmul.f32 %v622, %v596
        %v624 = vmul.f32 %v623, %v622
        %v625 = vmul.f32 0.5, %v624
        %v626 = vsub.f32 1.5, %v625
        %v627 = vmul.f32 %v622, %v626
        %vm628 = vweird.f32 %v596
        %vm629 = vweird.f32 %v622
        %vm630 = vmor %vm628, %vm629
        %v631 = vsel %vm630, %v622, %v627
        %v632 = vrsqrt.pop %v597
        %v633 = vmul.f32 %v632, %v597
        %v634 = vmul.f32 %v633, %v632
        %v635 = vmul.f32 0.5, %v634
        %v636 = vsub.f32 1.5, %v635
        %v637 = vmul.f32 %v632, %v636
        %vm638 = vweird.f32 %v597
        %vm639 = vweird.f32 %v632
        %vm640 = vmor %vm638, %vm639
        %v641 = vsel %vm640, %v632, %v637
        %v642 = vrsqrt.pop %v598
        %v643 = vmul.f32 %v642, %v598
        %v644 = vmul.f32 %v643, %v642
        %v645 = vmul.f32 0.5, %v644
        %v646 = vsub.f32 1.5, %v645
        %v647 = vmul.f32 %v642, %v646
        %vm648 = vweird.f32 %v598
        %vm649 = vweird.f32 %v642
        %vm650 = vmor %vm648, %vm649
        %v651 = vsel %vm650, %v642, %v647
        %v652 = vrsqrt.pop %v599
        %v653 = vmul.f32 %v652, %v599
        %v654 = vmul.f32 %v653, %v652
        %v655 = vmul.f32 0.5, %v654
        %v656 = vsub.f32 1.5, %v655
        %v657 = vmul.f32 %v652, %v656
        %vm658 = vweird.f32 %v599
        %vm659 = vweird.f32 %v652
        %vm660 = vmor %vm658, %vm659
        %v661 = vsel %vm660, %v652, %v657
        %v662 = vrsqrt.pop %v600
        %v663 = vmul.f32 %v662, %v600
        %v664 = vmul.f32 %v663, %v662
        %v665 = vmul.f32 0.5, %v664
        %v666 = vsub.f32 1.5, %v665
        %v667 = vmul.f32 %v662, %v666
        %vm668 = vweird.f32 %v600
        %vm669 = vweird.f32 %v662
        %vm670 = vmor %vm668, %vm669
        %v671 = vsel %vm670, %v662, %v667
        %v672 = vrsqrt.pop %v601
        %v673 = vmul.f32 %v672, %v601
        %v674 = vmul.f32 %v673, %v672
        %v675 = vmul.f32 0.5, %v674
        %v676 = vsub.f32 1.5, %v675
        %v677 = vmul.f32 %v672, %v676
        %vm678 = vweird.f32 %v601
        %vm679 = vweird.f32 %v672
        %vm680 = vmor %vm678, %vm679
        %v681 = vsel %vm680, %v672, %v677
        %v682 = vsub.f32 %v409, %v554
        %v683 = vsub.f32 %v410, %v555
        %v684 = vsub.f32 %v411, %v556
        %v685 = vsub.f32 %v412, %v557
        %v686 = vsub.f32 %v413, %v558
        %v687 = vsub.f32 %v414, %v559
        %v688 = vsub.f32 %v415, %v560
        %v689 = vsub.f32 %v416, %v561
        %v690 = vmul.f32 %v682, %v611
        %v691 = vmul.f32 %v683, %v621
        %v692 = vmul.f32 %v684, %v631
        %v693 = vmul.f32 %v685, %v641
        %v694 = vmul.f32 %v686, %v651
        %v695 = vmul.f32 %v687, %v661
        %v696 = vmul.f32 %v688, %v671
        %v697 = vmul.f32 %v689, %v681
        %v698 = vsub.f32 %v417, %v554
        %v699 = vsub.f32 %v418, %v555
        %v700 = vsub.f32 %v419, %v556
        %v701 = vsub.f32 %v420, %v557
        %v702 = vsub.f32 %v421, %v558
        %v703 = vsub.f32 %v422, %v559
        %v704 = vsub.f32 %v423, %v560
        %v705 = vsub.f32 %v424, %v561
        %v706 = vmul.f32 %v698, %v611
        %v707 = vmul.f32 %v699, %v621
        %v708 = vmul.f32 %v700, %v631
        %v709 = vmul.f32 %v701, %v641
        %v710 = vmul.f32 %v702, %v651
        %v711 = vmul.f32 %v703, %v661
        %v712 = vmul.f32 %v704, %v671
        %v713 = vmul.f32 %v705, %v681
        %v714 = vld [vmem:[%s2] sm:$0xff]
        %v715 = vld [vmem:[%s3] sm:$0xff]
        %v717 = vsel %vm425, %v706, 0
        %v720 = vsel %vm425, %v707, 0
        %v723 = vsel %vm425, %v708, 0
        %v726 = vsel %vm425, %v709, 0
        %v729 = vsel %vm425, %v710, 0
        %v732 = vsel %vm425, %v711, 0
        %v735 = vsel %vm425, %v712, 0
        %v738 = vsel %vm425, %v713, 0
        %740 = vmatpush.msra.mxu0 0.0
        %741 = vmatpush.msra.mxu0 0.0
        %742 = vmatpush.msra.mxu0 0.0
        %743 = vmatpush.msra.mxu0 0.0
        %744 = vmatpush.msra.mxu0 0.0
        %745 = vmatpush.msra.mxu0 0.0
        %746 = vmatpush.msra.mxu0 0.0
        %747 = vmatpush.msra.mxu0 0.0
        %748 = vmatpush.msra.mxu0 0.0
        %749 = vmatpush.msra.mxu0 0.0
        %750 = vmatpush.msra.mxu0 0.0
        %751 = vmatpush.msra.mxu0 0.0
        %752 = vmatpush.msra.mxu0 0.0
        %753 = vmatpush.msra.mxu0 0.0
        %754 = vmatpush.msra.mxu0 0.0
        %755 = vmatpush.msra.mxu0 %v715
        %756 = vmatmul.f32.gmra.mxu0 %v717
        %v757 = vpop.f32.mrf.mxu0
        %v758 = vadd.f32 0.0, %v757
        %759 = vmatmul.f32.gmra.mxu0 %v720
        %v760 = vpop.f32.mrf.mxu0
        %v761 = vadd.f32 0.0, %v760
        %762 = vmatmul.f32.gmra.mxu0 %v723
        %v763 = vpop.f32.mrf.mxu0
        %v764 = vadd.f32 0.0, %v763
        %765 = vmatmul.f32.gmra.mxu0 %v726
        %v766 = vpop.f32.mrf.mxu0
        %v767 = vadd.f32 0.0, %v766
        %768 = vmatmul.f32.gmra.mxu0 %v729
        %v769 = vpop.f32.mrf.mxu0
        %v770 = vadd.f32 0.0, %v769
        %771 = vmatmul.f32.gmra.mxu0 %v732
        %v772 = vpop.f32.mrf.mxu0
        %v773 = vadd.f32 0.0, %v772
        %774 = vmatmul.f32.gmra.mxu0 %v735
        %v775 = vpop.f32.mrf.mxu0
        %v776 = vadd.f32 0.0, %v775
        %777 = vmatmul.f32.gmra.mxu0 %v738
        %v778 = vpop.f32.mrf.mxu0
        %v779 = vadd.f32 0.0, %v778
        %780 = vdwg.mxu0
        %v782 = vsel %vm425, %v690, 0
        %v785 = vsel %vm425, %v691, 0
        %v788 = vsel %vm425, %v692, 0
        %v791 = vsel %vm425, %v693, 0
        %v794 = vsel %vm425, %v694, 0
        %v797 = vsel %vm425, %v695, 0
        %v800 = vsel %vm425, %v696, 0
        %v803 = vsel %vm425, %v697, 0
        %805 = vmatpush.msra.mxu0 0.0
        %806 = vmatpush.msra.mxu0 0.0
        %807 = vmatpush.msra.mxu0 0.0
        %808 = vmatpush.msra.mxu0 0.0
        %809 = vmatpush.msra.mxu0 0.0
        %810 = vmatpush.msra.mxu0 0.0
        %811 = vmatpush.msra.mxu0 0.0
        %812 = vmatpush.msra.mxu0 0.0
        %813 = vmatpush.msra.mxu0 0.0
        %814 = vmatpush.msra.mxu0 0.0
        %815 = vmatpush.msra.mxu0 0.0
        %816 = vmatpush.msra.mxu0 0.0
        %817 = vmatpush.msra.mxu0 0.0
        %818 = vmatpush.msra.mxu0 0.0
        %819 = vmatpush.msra.mxu0 0.0
        %820 = vmatpush.msra.mxu0 %v714
        %821 = vmatmul.f32.gmra.mxu0 %v782
        %v822 = vpop.f32.mrf.mxu0
        %v823 = vadd.f32 %v758, %v822
        %824 = vmatmul.f32.gmra.mxu0 %v785
        %v825 = vpop.f32.mrf.mxu0
        %v826 = vadd.f32 %v761, %v825
        %827 = vmatmul.f32.gmra.mxu0 %v788
        %v828 = vpop.f32.mrf.mxu0
        %v829 = vadd.f32 %v764, %v828
        %830 = vmatmul.f32.gmra.mxu0 %v791
        %v831 = vpop.f32.mrf.mxu0
        %v832 = vadd.f32 %v767, %v831
        %833 = vmatmul.f32.gmra.mxu0 %v794
        %v834 = vpop.f32.mrf.mxu0
        %v835 = vadd.f32 %v770, %v834
        %836 = vmatmul.f32.gmra.mxu0 %v797
        %v837 = vpop.f32.mrf.mxu0
        %v838 = vadd.f32 %v773, %v837
        %839 = vmatmul.f32.gmra.mxu0 %v800
        %v840 = vpop.f32.mrf.mxu0
        %v841 = vadd.f32 %v776, %v840
        %842 = vmatmul.f32.gmra.mxu0 %v803
        %v843 = vpop.f32.mrf.mxu0
        %v844 = vadd.f32 %v779, %v843
        %845 = vdwg.mxu0
        %v846 = vld [vmem:[%s4] sm:$0x1]
        %v848 = vperm.slane %v846, 0
        %v850 = vadd.f32 %v823, %v848
        %v851 = vadd.f32 %v826, %v848
        %v852 = vadd.f32 %v829, %v848
        %v853 = vadd.f32 %v832, %v848
        %v854 = vadd.f32 %v835, %v848
        %v855 = vadd.f32 %v838, %v848
        %v856 = vadd.f32 %v841, %v848
        %v857 = vadd.f32 %v844, %v848
        %858 = vst.msk [vmem:[%s407] sm:$0xff] %vm425, %v850
        %859 = vst.msk [vmem:[%s407 + $0x8] sm:$0xff] %vm425, %v851
        %860 = vst.msk [vmem:[%s407 + $0x10] sm:$0xff] %vm425, %v852
        %861 = vst.msk [vmem:[%s407 + $0x18] sm:$0xff] %vm425, %v853
        %862 = vst.msk [vmem:[%s407 + $0x20] sm:$0xff] %vm425, %v854
        %863 = vst.msk [vmem:[%s407 + $0x28] sm:$0xff] %vm425, %v855
        %864 = vst.msk [vmem:[%s407 + $0x30] sm:$0xff] %vm425, %v856
        %865 = vst.msk [vmem:[%s407 + $0x38] sm:$0xff] %vm425, %v857
        %s866 = smul.u32 8, %s21
        %p867 = scmp.lt.s32.totalorder %s20, 1
        %s868 = scalar_select %p867, %s20, 1
        %p869 = scmp.lt.s32.totalorder %s866, 7
        %s870 = scalar_select %p869, %s866, 7
        %s871 = smul.addr %s868, 8
        %s872 = sadd.s32 %s870, %s871
        %s873 = smul.addr %s872, 8
        %s874 = scalar_lea.vmem %s5, %s873
        // Predicated region
        $region117: #{patch_merging_forward.1} parent=107 // pred_check
          %p875 = pneg %p167
        $region118: #{patch_merging_forward.1} parent=107 // pred_check_branch
          %877 = sbr.rel (%p875) target = $region120
        $region119: #{patch_merging_forward.1} parent=107 // pred_region
          %s878 = smul.u32 8, %s21
        $region120: #{patch_merging_forward.1} parent=107 // pred_fallthru
          _
      $region108: #{patch_merging_forward.1} parent=5 // pred_fallthru
        _
      %p879 = scmp.le.s32.totalorder 2, %s11
      // Predicated region
      $region121: #{patch_merging_forward.1} parent=5 // pred_check
        %p880 = pneg %p879
      $region122: #{patch_merging_forward.1} parent=5 // pred_check_branch
        %882 = sbr.rel (%p880) target = $region124
      $region123: #{patch_merging_forward.1} parent=5 // pred_region
        %s883 = ssub.s32 %s11, 2
        // Predicated region
        $region125: #{patch_merging_forward.1} parent=123 // pred_check
          %p884 = pneg %p173
        $region126: #{patch_merging_forward.1} parent=123 // pred_check_branch
          %886 = sbr.rel (%p884) target = $region128
        $region127: #{patch_merging_forward.1} parent=123 // pred_region
          %s887 = smul.u32 8, %s23
          %p888 = scmp.lt.s32.totalorder %s22, 1
          %s889 = scalar_select %p888, %s22, 1
          %p890 = scmp.lt.s32.totalorder %s887, 7
          %s891 = scalar_select %p890, %s887, 7
          %s892 = smul.addr %s889, 8
          %s893 = sadd.s32 %s891, %s892
          %s894 = smul.addr %s893, 8
          %s895 = scalar_lea.vmem %s5, %s894
        $region128: #{patch_merging_forward.1} parent=123 // pred_fallthru
          _
      $region124: #{patch_merging_forward.1} parent=5 // pred_fallthru
        _
    $region6: #{patch_merging_forward.1} parent=1 // loop_footer
      %s15 = sadd.s32 1, %s11
    $region7: #{patch_merging_forward.1} parent=1 // loop_footer_branch
      %10 = sbr.rel target = $region3
    $region8: #{patch_merging_forward.1} parent=1 // loop_exit
      _

</llo_original>
